<compile_context>
chip_gen: v7x
topology: tpu7x:2x2x1
jax: 0.10.0
libtpu: 0.0.40
codegen_flags: <defaults>
</compile_context>

<pallas_src>
import jax
import jax.numpy as jnp
from jax.experimental import pallas as pl
from jax.experimental.pallas import tpu as pltpu

BN_EPS = 1e-5
VMEM_LIMIT = 32 * 1024 * 1024


# ----------------------------------------------------------------------------- utils
def _round_up(v, m):
    return ((v + m - 1) // m) * m


def _choose_tk(Kp, cap=2048):
    """Largest multiple of 128 that divides Kp (Kp is a multiple of 128) and <= cap."""
    best = 128
    t = 128
    while t <= min(Kp, cap):
        if Kp % t == 0:
            best = t
        t += 128
    return best


# ------------------------------------------------------------ fused conv-as-GEMM + BN
def _make_gemm_bn_kernel(relu, has_res):
    def kernel(x_ref, w_ref, s_ref, b_ref, *rest):
        if has_res:
            r_ref, o_ref, acc_ref = rest
        else:
            o_ref, acc_ref = rest
        k = pl.program_id(2)

        @pl.when(k == 0)
        def _():
            acc_ref[...] = jnp.zeros_like(acc_ref)

        acc_ref[...] += jnp.dot(x_ref[...], w_ref[...],
                                preferred_element_type=jnp.float32)

        @pl.when(k == pl.num_programs(2) - 1)
        def _():
            y = acc_ref[...] * s_ref[...] + b_ref[...]
            if has_res:
                y = y + r_ref[...].astype(jnp.float32)
            if relu:
                y = jnp.maximum(y, 0.0)
            o_ref[...] = y.astype(o_ref.dtype)

    return kernel


def fused_gemm_bn(x, wmat, scale, bias, n_valid, residual=None, relu=True):
    """y = relu?((x @ wmat) * scale + bias [+ residual]).

    x:        (M, K)   any float dtype (cast to bf16)
    wmat:     (Kp, Np) bf16, pre-padded to multiples of 128
    scale:    (1, Np)  f32
    bias:     (1, Np)  f32
    residual: (M, n_valid) or None
    Returns (M, n_valid) bf16.
    """
    M, K = x.shape
    Kp, Np = wmat.shape

    tm = 256 if M >= 4096 else 128
    tn = Np if Np <= 512 else 512
    if Np % tn:
        tn = 128
    tk = _choose_tk(Kp)
    Mp = _round_up(M, tm)

    xp = jnp.pad(x.astype(jnp.bfloat16), ((0, Mp - M), (0, Kp - K)))

    has_res = residual is not None
    in_specs = [
        pl.BlockSpec((tm, tk), lambda i, j, k: (i, k)),
        pl.BlockSpec((tk, tn), lambda i, j, k: (k, j)),
        pl.BlockSpec((1, tn), lambda i, j, k: (0, j)),
        pl.BlockSpec((1, tn), lambda i, j, k: (0, j)),
    ]
    args = [xp, wmat, scale, bias]
    if has_res:
        rp = jnp.pad(residual.astype(jnp.bfloat16),
                     ((0, Mp - M), (0, Np - residual.shape[1])))
        in_specs.append(pl.BlockSpec((tm, tn), lambda i, j, k: (i, j)))
        args.append(rp)

    out = pl.pallas_call(
        _make_gemm_bn_kernel(relu, has_res),
        out_shape=jax.ShapeDtypeStruct((Mp, Np), jnp.bfloat16),
        grid_spec=pltpu.PrefetchScalarGridSpec(
            num_scalar_prefetch=0,
            grid=(Mp // tm, Np // tn, Kp // tk),
            in_specs=in_specs,
            out_specs=pl.BlockSpec((tm, tn), lambda i, j, k: (i, j)),
            scratch_shapes=[pltpu.VMEM((tm, tn), jnp.float32)],
        ),
        compiler_params=pltpu.CompilerParams(
            dimension_semantics=("parallel", "parallel", "arbitrary"),
            vmem_limit_bytes=VMEM_LIMIT),
    )(*args)
    return out[:M, :n_valid]


def _im2col(x, kh, kw, stride, padding):
    # x: (N, H, W, C) -> (N*Ho*Wo, kh*kw*C), K-axis ordering = (dh, dw, c).
    N, H, W, C = x.shape
    xp = jnp.pad(x, ((0, 0), (padding, padding), (padding, padding), (0, 0)))
    Ho = (H + 2 * padding - kh) // stride + 1
    Wo = (W + 2 * padding - kw) // stride + 1
    cols = []
    for dh in range(kh):
        for dw in range(kw):
            cols.append(xp[:, dh:dh + stride * (Ho - 1) + 1:stride,
                           dw:dw + stride * (Wo - 1) + 1:stride, :])
    patches = jnp.stack(cols, axis=3)  # (N, Ho, Wo, kh*kw, C)
    return patches.reshape(N * Ho * Wo, kh * kw * C), Ho, Wo


def conv_bn(x, p, stride, padding, relu=True, residual=None):
    """Conv2d(bias=False) + folded BatchNorm (+ optional residual) (+ optional ReLU)."""
    patches, Ho, Wo = _im2col(x, p['kh'], p['kw'], stride, padding)
    res2d = None if residual is None else residual.reshape(-1, p['cout'])
    y = fused_gemm_bn(patches, p['wmat'], p['scale'], p['bias'], p['cout'],
                      residual=res2d, relu=relu)
    return y.reshape(x.shape[0], Ho, Wo, p['cout'])


# ------------------------------------------------------------------- MaxPool(3, 2, 1)
def _maxpool_kernel(t_ref, o_ref):
    # t_ref: (9, 1, hb, Wo*C) -- 9 taps of the 3x3/stride-2 window, lane-dense last dim.
    m = t_ref[0]
    for i in range(1, 9):
        m = jnp.maximum(m, t_ref[i])
    o_ref[...] = m


def maxpool_3x3_s2_p1(x):
    N, H, W, C = x.shape
    Ho, Wo = H // 2, W // 2
    neg = float(jnp.finfo(x.dtype).min)
    xp = jnp.pad(x, ((0, 0), (1, 1), (1, 1), (0, 0)), constant_values=neg)
    taps = []
    for dh in range(3):
        for dw in range(3):
            taps.append(xp[:, dh:dh + 2 * Ho:2, dw:dw + 2 * Wo:2, :])
    WoC = Wo * C                               # 56*64 = 3584, a multiple of 128
    t = jnp.stack(taps, axis=0).reshape(9, N, Ho, WoC)

    hb = 8 if Ho % 8 == 0 else Ho
    out = pl.pallas_call(
        _maxpool_kernel,
        out_shape=jax.ShapeDtypeStruct((N, Ho, WoC), x.dtype),
        grid=(N, Ho // hb),
        in_specs=[pl.BlockSpec((9, 1, hb, WoC), lambda n, h: (0, n, h, 0))],
        out_specs=pl.BlockSpec((1, hb, WoC), lambda n, h: (n, h, 0)),
        compiler_params=pltpu.CompilerParams(
            dimension_semantics=("parallel", "parallel"),
            vmem_limit_bytes=VMEM_LIMIT),
    )(t)
    return out.reshape(N, Ho, Wo, C)


# ------------------------------------------------------------ AvgPool(7) + Linear head
def _avgpool_fc_kernel(x_ref, w_ref, b_ref, o_ref):
    pooled = jnp.mean(x_ref[...].astype(jnp.float32), axis=1)    # (N, 512)
    o_ref[...] = jnp.dot(pooled, w_ref[...],
                         preferred_element_type=jnp.float32) + b_ref[...]


def avgpool_fc(x, wt, bp, ncls):
    # x: (N, 7, 7, 512) bf16;  F.avg_pool2d(x, 7) -> view(N, 512) -> Linear(512, ncls)
    N, H, W, C = x.shape
    xf = x.reshape(N, H * W, C)
    out = pl.pallas_call(
        _avgpool_fc_kernel,
        out_shape=jax.ShapeDtypeStruct((N, wt.shape[1]), jnp.float32),
        compiler_params=pltpu.CompilerParams(vmem_limit_bytes=VMEM_LIMIT),
    )(xf, wt, bp)
    return out[:, :ncls]


# ------------------------------------------------------------------------ parameters
def _prep_conv_bn(w, gamma, beta, mean, var):
    """Fold BN into scale/bias and pre-build the padded bf16 GEMM weight."""
    cout, cin, kh, kw = w.shape
    scale = gamma / jnp.sqrt(var + BN_EPS)
    bias = beta - mean * scale
    K = cin * kh * kw
    Kp = _round_up(K, 128)
    Np = _round_up(cout, 128)
    wmat = jnp.transpose(w, (2, 3, 1, 0)).reshape(K, cout)       # (dh,dw,cin) x cout
    wmat = jnp.pad(wmat, ((0, Kp - K), (0, Np - cout))).astype(jnp.bfloat16)
    scale_p = jnp.pad(scale.reshape(1, cout), ((0, 0), (0, Np - cout)))
    bias_p = jnp.pad(bias.reshape(1, cout), ((0, 0), (0, Np - cout)))
    return {'wmat': wmat, 'scale': scale_p, 'bias': bias_p,
            'kh': kh, 'kw': kw, 'cin': cin, 'cout': cout}


def _conv_bn_init(key, cin, cout, ksize):
    kw_, kg, kb, km, kv = jax.random.split(key, 5)
    fan_in = cin * ksize * ksize
    w = jax.random.normal(kw_, (cout, cin, ksize, ksize), jnp.float32) * jnp.sqrt(2.0 / fan_in)
    gamma = 1.0 + 0.1 * jax.random.normal(kg, (cout,), jnp.float32)
    beta = 0.1 * jax.random.normal(kb, (cout,), jnp.float32)
    mean = 0.1 * jax.random.normal(km, (cout,), jnp.float32)
    var = 1.0 + 0.1 * jax.random.uniform(kv, (cout,), jnp.float32)
    return _prep_conv_bn(w, gamma, beta, mean, var)


def init_resnet34_params(key, num_classes=10):
    keys = iter(jax.random.split(key, 64))
    params = {'pre': _conv_bn_init(next(keys), 3, 64, 7)}
    cfg = [(64, 64, 3, 1), (64, 128, 4, 2), (128, 256, 6, 2), (256, 512, 3, 2)]
    layers = []
    for cin, cout, nblk, stride in cfg:
        blocks = []
        for b in range(nblk):
            s = stride if b == 0 else 1
            ic = cin if b == 0 else cout
            blk = {'stride': s,
                   'conv1': _conv_bn_init(next(keys), ic, cout, 3),
                   'conv2': _conv_bn_init(next(keys), cout, cout, 3)}
            if b == 0:  # _make_layer always gives the first block a 1x1 conv+BN shortcut
                blk['sc'] = _conv_bn_init(next(keys), ic, cout, 1)
            blocks.append(blk)
        layers.append(blocks)
    params['layers'] = layers
    kf1, kf2 = jax.random.split(next(keys))
    fc_w = jax.random.normal(kf1, (num_classes, 512), jnp.float32) / jnp.sqrt(512.0)
    fc_b = 0.01 * jax.random.normal(kf2, (num_classes,), jnp.float32)
    ncls_p = _round_up(num_classes, 128)
    params['fc_wt'] = jnp.pad(jnp.transpose(fc_w), ((0, 0), (0, ncls_p - num_classes)))
    params['fc_bp'] = jnp.pad(fc_b.reshape(1, num_classes),
                              ((0, 0), (0, ncls_p - num_classes)))
    params['num_classes'] = num_classes
    return params


# ---------------------------------------------------------------------------- forward
def resnet_forward(params, x_nchw):
    x = jnp.transpose(x_nchw, (0, 2, 3, 1)).astype(jnp.bfloat16)   # NCHW -> NHWC, bf16
    # pre: conv7x7/s2 + BN + ReLU, then MaxPool 3x3/s2/p1
    x = conv_bn(x, params['pre'], stride=2, padding=3, relu=True)
    x = maxpool_3x3_s2_p1(x)
    # residual layers
    for layer in params['layers']:
        for blk in layer:
            s = blk['stride']
            out1 = conv_bn(x, blk['conv1'], stride=s, padding=1, relu=True)
            if 'sc' in blk:
                residual = conv_bn(x, blk['sc'], stride=s, padding=0, relu=False)
            else:
                residual = x
            # second conv + BN, add residual, ReLU -- all fused in the GEMM epilogue
            x = conv_bn(out1, blk['conv2'], stride=1, padding=1, relu=True,
                        residual=residual)
    return avgpool_fc(x, params['fc_wt'], params['fc_bp'], params['num_classes'])


# ------------------------------------------------------------------------------ main
if __name__ == "__main__":
    # Quick numerical sanity check of the fused GEMM+BN(+ReLU) kernel.
    k1, k2, k3, k4 = jax.random.split(jax.random.PRNGKey(1), 4)
    Mc, Kc, Nc = 100, 147, 64
    a = jax.random.normal(k1, (Mc, Kc), jnp.float32).astype(jnp.bfloat16)
    wc = 0.1 * jax.random.normal(k2, (Kc, Nc), jnp.float32)
    sc = 1.0 + 0.1 * jax.random.normal(k3, (Nc,), jnp.float32)
    bc = 0.1 * jax.random.normal(k4, (Nc,), jnp.float32)
    Kp, Np = _round_up(Kc, 128), _round_up(Nc, 128)
    wp = jnp.pad(wc, ((0, Kp - Kc), (0, Np - Nc))).astype(jnp.bfloat16)
    sp = jnp.pad(sc.reshape(1, Nc), ((0, 0), (0, Np - Nc)))
    bp = jnp.pad(bc.reshape(1, Nc), ((0, 0), (0, Np - Nc)))
    got = fused_gemm_bn(a, wp, sp, bp, Nc, relu=True).astype(jnp.float32)
    wbf = wp[:Kc, :Nc].astype(jnp.float32)
    ref = jnp.maximum((a.astype(jnp.float32) @ wbf) * sc + bc, 0.0)
    err = float(jnp.max(jnp.abs(got - ref)))
    assert err < 1e-1, f"fused GEMM+BN mismatch: max abs err = {err}"

    # Full ResNet34 forward.  Input spatial size must be 224 so that layer4 emits 7x7
    # and avg_pool2d(x, 7) + view() + Linear(512, num_classes) matches PyTorch exactly.
    key = jax.random.PRNGKey(0)
    kp, kx = jax.random.split(key)
    num_classes = 10                      # num_classes is configurable in the module
    params = init_resnet34_params(kp, num_classes=num_classes)
    x = jax.random.normal(kx, (2, 3, 224, 224), jnp.float32)      # NCHW, like PyTorch

    fwd = jax.jit(lambda inp: resnet_forward(params, inp))
    logits = jax.block_until_ready(fwd(x))
    assert logits.shape == (2, num_classes)
    assert bool(jnp.all(jnp.isfinite(logits)))
    print("KERNEL_OK")
</pallas_src>

<mosaic_0001>
module attributes {stable_mosaic.version = 11 : i64} {
  func.func @kernel(%arg0: i32, %arg1: i32, %arg2: i32, %arg3: memref<128x256xbf16, #tpu.memory_space<vmem>>, %arg4: memref<256x128xbf16, #tpu.memory_space<vmem>>, %arg5: memref<1x128xf32, #tpu.memory_space<vmem>>, %arg6: memref<1x128xf32, #tpu.memory_space<vmem>>, %arg7: memref<128x128xbf16, #tpu.memory_space<vmem>>, %arg8: memref<128x128xf32, #tpu.memory_space<vmem>>) attributes {dimension_semantics = [#tpu.dimension_semantics<parallel>, #tpu.dimension_semantics<parallel>, #tpu.dimension_semantics<arbitrary>], iteration_bounds = array<i64: 1, 1, 1>, scalar_prefetch = 0 : i64, scratch_operands = 1 : i64, tpu.core_type = #tpu.core_type<tc>, window_params = [{transform_indices = @transform_0, window_bounds = array<i64: 128, 256>}, {transform_indices = @transform_1, window_bounds = array<i64: 256, 128>}, {transform_indices = @transform_2, window_bounds = array<i64: 1, 128>}, {transform_indices = @transform_3, window_bounds = array<i64: 1, 128>}, {transform_indices = @transform_4, window_bounds = array<i64: 128, 128>}]} {
    %c0_i32 = arith.constant 0 : i32
    %0 = arith.cmpi eq, %arg2, %c0_i32 : i32
    %1 = arith.extui %0 : i1 to i32
    %c0_i32_0 = arith.constant 0 : i32
    %2 = arith.cmpi ne, %1, %c0_i32_0 : i32
    scf.if %2 {
      %cst_10 = arith.constant 0.000000e+00 : f32
      %12 = vector.broadcast %cst_10 : f32 to vector<128x128xf32>
      %c0_11 = arith.constant 0 : index
      %c0_12 = arith.constant 0 : index
      %13 = vector.load %arg8[%c0_11, %c0_12] : memref<128x128xf32, #tpu.memory_space<vmem>>, vector<128x128xf32>
      tpu.vector_store %arg8[%c0_11, %c0_12], %12 {strides = array<i32>} : memref<128x128xf32, #tpu.memory_space<vmem>>, vector<128x128xf32>,
    } else {
    }
    %c0 = arith.constant 0 : index
    %c0_1 = arith.constant 0 : index
    %3 = vector.load %arg8[%c0, %c0_1] : memref<128x128xf32, #tpu.memory_space<vmem>>, vector<128x128xf32>
    %c0_2 = arith.constant 0 : index
    %c0_3 = arith.constant 0 : index
    %4 = vector.load %arg3[%c0_2, %c0_3] : memref<128x256xbf16, #tpu.memory_space<vmem>>, vector<128x256xbf16>
    %c0_4 = arith.constant 0 : index
    %c0_5 = arith.constant 0 : index
    %5 = vector.load %arg4[%c0_4, %c0_5] : memref<256x128xbf16, #tpu.memory_space<vmem>>, vector<256x128xbf16>
    %cst = arith.constant dense<0.000000e+00> : vector<128x128xf32>
    %6 = tpu.matmul %4, %5, %cst {dimension_numbers = #tpu.dot_dimension_numbers<[1], [0], [0], [1], [0, 0, 1, 1], [], []>} : vector<128x256xbf16>, vector<256x128xbf16>, vector<128x128xf32> -> vector<128x128xf32>
    %7 = arith.addf %3, %6 : vector<128x128xf32>
    %c0_6 = arith.constant 0 : index
    %c0_7 = arith.constant 0 : index
    %8 = vector.load %arg8[%c0_6, %c0_7] : memref<128x128xf32, #tpu.memory_space<vmem>>, vector<128x128xf32>
    tpu.vector_store %arg8[%c0_6, %c0_7], %7 {strides = array<i32>} : memref<128x128xf32, #tpu.memory_space<vmem>>, vector<128x128xf32>,
    %c0_i32_8 = arith.constant 0 : i32
    %9 = arith.cmpi eq, %arg2, %c0_i32_8 : i32
    %10 = arith.extui %9 : i1 to i32
    %c0_i32_9 = arith.constant 0 : i32
    %11 = arith.cmpi ne, %10, %c0_i32_9 : i32
    scf.if %11 {
      %c0_10 = arith.constant 0 : index
      %c0_11 = arith.constant 0 : index
      %12 = vector.load %arg8[%c0_10, %c0_11] : memref<128x128xf32, #tpu.memory_space<vmem>>, vector<128x128xf32>
      %c0_12 = arith.constant 0 : index
      %c0_13 = arith.constant 0 : index
      %13 = vector.load %arg5[%c0_12, %c0_13] : memref<1x128xf32, #tpu.memory_space<vmem>>, vector<1x128xf32>
      %14 = vector.broadcast %13 : vector<1x128xf32> to vector<128x128xf32>
      %15 = arith.mulf %12, %14 : vector<128x128xf32>
      %c0_14 = arith.constant 0 : index
      %c0_15 = arith.constant 0 : index
      %16 = vector.load %arg6[%c0_14, %c0_15] : memref<1x128xf32, #tpu.memory_space<vmem>>, vector<1x128xf32>
      %17 = vector.broadcast %16 : vector<1x128xf32> to vector<128x128xf32>
      %18 = arith.addf %15, %17 : vector<128x128xf32>
      %cst_16 = arith.constant 0.000000e+00 : f32
      %19 = vector.broadcast %cst_16 : f32 to vector<128x128xf32>
      %20 = arith.maximumf %18, %19 : vector<128x128xf32>
      %21 = arith.truncf %20 : vector<128x128xf32> to vector<128x128xbf16>
      %c0_17 = arith.constant 0 : index
      %c0_18 = arith.constant 0 : index
      %22 = vector.load %arg7[%c0_17, %c0_18] : memref<128x128xbf16, #tpu.memory_space<vmem>>, vector<128x128xbf16>
      tpu.vector_store %arg7[%c0_17, %c0_18], %21 {strides = array<i32>} : memref<128x128xbf16, #tpu.memory_space<vmem>>, vector<128x128xbf16>,
    } else {
    }
    return
  }
  func.func @transform_0(%arg0: i32, %arg1: i32, %arg2: i32) -> (i32, i32) {
    %c0_i32 = arith.constant 0 : i32
    return %arg0, %arg2 : i32, i32
  }
  func.func @transform_1(%arg0: i32, %arg1: i32, %arg2: i32) -> (i32, i32) {
    %c0_i32 = arith.constant 0 : i32
    return %arg2, %arg1 : i32, i32
  }
  func.func @transform_2(%arg0: i32, %arg1: i32, %arg2: i32) -> (i32, i32) {
    %c0_i32 = arith.constant 0 : i32
    %c0_i32_0 = arith.constant 0 : i32
    return %c0_i32, %arg1 : i32, i32
  }
  func.func @transform_3(%arg0: i32, %arg1: i32, %arg2: i32) -> (i32, i32) {
    %c0_i32 = arith.constant 0 : i32
    %c0_i32_0 = arith.constant 0 : i32
    return %c0_i32, %arg1 : i32, i32
  }
  func.func @transform_4(%arg0: i32, %arg1: i32, %arg2: i32) -> (i32, i32) {
    %c0_i32 = arith.constant 0 : i32
    return %arg0, %arg1 : i32, i32
  }
}

</mosaic_0001>

<llo_original>
// kernel: tpu_custom_call.1
$region0: #{tpu_custom_call.1}
  #allocation0 [shape = 'u32[]', space=smem, size = 0x4, offset = 0x4, fixed_abs, tag = 'smem constant byte address 0x4 - core index']
  #allocation1 [shape = 'u32[144,128]{1,0:T(1,128)}', space=vmem, size = 0x12000, scoped, tag = 'internal scratch']
  #allocation2 [shape = 'f32[128,128]{1,0:T(8,128)}', space=vmem, size = 0x10000, scoped, tag = 'scratch operand']
  %s0 = inlined_call_operand.hbm [shape: bf16[128,256], index: 0, kind: input, shape index: {}]
  %s1 = inlined_call_operand.hbm [shape: bf16[256,128], index: 1, kind: input, shape index: {}]
  %s2 = inlined_call_operand.vmem [shape: f32[1,128], index: 2, kind: input, shape index: {}]
  %s3 = inlined_call_operand.vmem [shape: f32[1,128], index: 3, kind: input, shape index: {}]
  %s4 = inlined_call_operand.hbm [shape: bf16[128,128], index: 4, kind: output, shape index: {}]
  %s5 = sld [smem:[#allocation0]]
  $region42: #{tpu_custom_call.1} parent=0
    _
  %s7 = ssub.s32 1, %s5
  %s8 = scalar_select 0, %s7, %s5
  $region1: #{tpu_custom_call.1} parent=0
    #allocation3 [shape = 'u8[65536]{0}', space=vmem, size = 0x10000, scoped, tag = 'input window, operand 0, single buffered']
    #allocation4 [shape = 's32[1]{0}', space=sflag, size = 0x4, scoped, tag = 'scoped memory for tpu_custom_call.1']
    #allocation5 [shape = 's32[1]{0}', space=sflag, size = 0x4, scoped, tag = 'scoped memory for tpu_custom_call.1']
    #allocation6 [shape = 'u8[65536]{0}', space=vmem, size = 0x10000, scoped, tag = 'input window, operand 1, single buffered']
    #allocation7 [shape = 's32[1]{0}', space=sflag, size = 0x4, scoped, tag = 'scoped memory for tpu_custom_call.1']
    #allocation8 [shape = 'u8[32768]{0}', space=vmem, size = 0x8000, scoped, tag = 'output window, operand 0, single buffered']
    %9 = vsyncpa [#allocation4], 0
    %10 = vsyncpa [#allocation7], 0
    %11 = vsyncpa [#allocation5], 0
    // Predicated region
    $region2: #{tpu_custom_call.1} parent=1 // pred_check
      _
    $region3: #{tpu_custom_call.1} parent=1 // pred_check_branch
      %13 = sbr.rel (0) target = $region5
    $region4: #{tpu_custom_call.1} parent=1 // pred_region
      %s15 = ssub.s32 2048, 2048
      %16 = vsyncadd [#allocation4], %s15
      %s17 = sshll.u32 [#allocation3], 4
      %s18 = int_to_ptr.vmem [resolvable:$true] %s17
      %23 = dma.hbm_to_vmem [thread:$0]  %s0, 2048, %s18, [#allocation4], 128, 128, 8
    $region5: #{tpu_custom_call.1} parent=1 // pred_fallthru
      _
    // Predicated region
    $region6: #{tpu_custom_call.1} parent=1 // pred_check
      _
    $region7: #{tpu_custom_call.1} parent=1 // pred_check_branch
      %25 = sbr.rel (0) target = $region9
    $region8: #{tpu_custom_call.1} parent=1 // pred_region
      %s27 = ssub.s32 2048, 2048
      %28 = vsyncadd [#allocation7], %s27
      %s29 = sshll.u32 [#allocation6], 4
      %s30 = int_to_ptr.vmem [resolvable:$true] %s29
      %35 = dma.hbm_to_vmem [thread:$0]  %s1, 2048, %s30, [#allocation7], 64, 64, 4
    $region9: #{tpu_custom_call.1} parent=1 // pred_fallthru
      _
    // Predicated region
    $region10: #{tpu_custom_call.1} parent=1 // pred_check
      _
    $region11: #{tpu_custom_call.1} parent=1 // pred_check_branch
      %37 = sbr.rel (0) target = $region13
    $region12: #{tpu_custom_call.1} parent=1 // pred_region
      _
    $region13: #{tpu_custom_call.1} parent=1 // pred_fallthru
      _
    // Predicated region
    $region14: #{tpu_custom_call.1} parent=1 // pred_check
      _
    $region15: #{tpu_custom_call.1} parent=1 // pred_check_branch
      %39 = sbr.rel (0) target = $region17
    $region16: #{tpu_custom_call.1} parent=1 // pred_region
      _
    $region17: #{tpu_custom_call.1} parent=1 // pred_fallthru
      _
    // Predicated region
    $region18: #{tpu_custom_call.1} parent=1 // pred_check
      _
    $region19: #{tpu_custom_call.1} parent=1 // pred_check_branch
      %41 = sbr.rel (0) target = $region21
    $region20: #{tpu_custom_call.1} parent=1 // pred_region
      %42 = dma.done [#allocation4], 2048
    $region21: #{tpu_custom_call.1} parent=1 // pred_fallthru
      _
    // Predicated region
    $region22: #{tpu_custom_call.1} parent=1 // pred_check
      _
    $region23: #{tpu_custom_call.1} parent=1 // pred_check_branch
      %44 = sbr.rel (0) target = $region25
    $region24: #{tpu_custom_call.1} parent=1 // pred_region
      %45 = dma.done [#allocation7], 2048
    $region25: #{tpu_custom_call.1} parent=1 // pred_fallthru
      _
    %p47 = scmp.eq.s32.totalorder 0, 0
    // Predicated region
    $region26: #{tpu_custom_call.1} parent=1 // pred_check
      %p48 = pneg %p47
    $region27: #{tpu_custom_call.1} parent=1 // pred_check_branch
      %50 = sbr.rel (%p48) target = $region29
    $region28: #{tpu_custom_call.1} parent=1 // pred_region
      %51 = vst [vmem:[#allocation2] sm:$0xff] 0.0
      %52 = vst [vmem:[#allocation2 + $0x8] sm:$0xff] 0.0
      %53 = vst [vmem:[#allocation2 + $0x10] sm:$0xff] 0.0
      %54 = vst [vmem:[#allocation2 + $0x18] sm:$0xff] 0.0
      %55 = vst [vmem:[#allocation2 + $0x20] sm:$0xff] 0.0
      %56 = vst [vmem:[#allocation2 + $0x28] sm:$0xff] 0.0
      %57 = vst [vmem:[#allocation2 + $0x30] sm:$0xff] 0.0
      %58 = vst [vmem:[#allocation2 + $0x38] sm:$0xff] 0.0
      %59 = vst [vmem:[#allocation2 + $0x40] sm:$0xff] 0.0
      %60 = vst [vmem:[#allocation2 + $0x48] sm:$0xff] 0.0
      %61 = vst [vmem:[#allocation2 + $0x50] sm:$0xff] 0.0
      %62 = vst [vmem:[#allocation2 + $0x58] sm:$0xff] 0.0
      %63 = vst [vmem:[#allocation2 + $0x60] sm:$0xff] 0.0
      %64 = vst [vmem:[#allocation2 + $0x68] sm:$0xff] 0.0
      %65 = vst [vmem:[#allocation2 + $0x70] sm:$0xff] 0.0
      %66 = vst [vmem:[#allocation2 + $0x78] sm:$0xff] 0.0
    $region29: #{tpu_custom_call.1} parent=1 // pred_fallthru
      _
    %v67 = vld [vmem:[#allocation2] sm:$0xff]
    %v68 = vld [vmem:[#allocation2 + $0x8] sm:$0xff]
    %v69 = vld [vmem:[#allocation2 + $0x10] sm:$0xff]
    %v70 = vld [vmem:[#allocation2 + $0x18] sm:$0xff]
    %v71 = vld [vmem:[#allocation2 + $0x20] sm:$0xff]
    %v72 = vld [vmem:[#allocation2 + $0x28] sm:$0xff]
    %v73 = vld [vmem:[#allocation2 + $0x30] sm:$0xff]
    %v74 = vld [vmem:[#allocation2 + $0x38] sm:$0xff]
    %v75 = vld [vmem:[#allocation2 + $0x40] sm:$0xff]
    %v76 = vld [vmem:[#allocation2 + $0x48] sm:$0xff]
    %v77 = vld [vmem:[#allocation2 + $0x50] sm:$0xff]
    %v78 = vld [vmem:[#allocation2 + $0x58] sm:$0xff]
    %v79 = vld [vmem:[#allocation2 + $0x60] sm:$0xff]
    %v80 = vld [vmem:[#allocation2 + $0x68] sm:$0xff]
    %v81 = vld [vmem:[#allocation2 + $0x70] sm:$0xff]
    %v82 = vld [vmem:[#allocation2 + $0x78] sm:$0xff]
    %v83 = vld [vmem:[#allocation3] sm:$0xff]
    %v84 = vld [vmem:[#allocation3 + $0x8] sm:$0xff]
    %v85 = vld [vmem:[#allocation3 + $0x10] sm:$0xff]
    %v86 = vld [vmem:[#allocation3 + $0x18] sm:$0xff]
    %v87 = vld [vmem:[#allocation3 + $0x20] sm:$0xff]
    %v88 = vld [vmem:[#allocation3 + $0x28] sm:$0xff]
    %v89 = vld [vmem:[#allocation3 + $0x30] sm:$0xff]
    %v90 = vld [vmem:[#allocation3 + $0x38] sm:$0xff]
    %v91 = vld [vmem:[#allocation3 + $0x40] sm:$0xff]
    %v92 = vld [vmem:[#allocation3 + $0x48] sm:$0xff]
    %v93 = vld [vmem:[#allocation3 + $0x50] sm:$0xff]
    %v94 = vld [vmem:[#allocation3 + $0x58] sm:$0xff]
    %v95 = vld [vmem:[#allocation3 + $0x60] sm:$0xff]
    %v96 = vld [vmem:[#allocation3 + $0x68] sm:$0xff]
    %v97 = vld [vmem:[#allocation3 + $0x70] sm:$0xff]
    %v98 = vld [vmem:[#allocation3 + $0x78] sm:$0xff]
    %v99 = vld [vmem:[#allocation6] sm:$0xf]
    %v100 = vld [vmem:[#allocation6 + $0x4] sm:$0xf]
    %v101 = vld [vmem:[#allocation6 + $0x8] sm:$0xf]
    %v102 = vld [vmem:[#allocation6 + $0xc] sm:$0xf]
    %v103 = vld [vmem:[#allocation6 + $0x10] sm:$0xf]
    %v104 = vld [vmem:[#allocation6 + $0x14] sm:$0xf]
    %v105 = vld [vmem:[#allocation6 + $0x18] sm:$0xf]
    %v106 = vld [vmem:[#allocation6 + $0x1c] sm:$0xf]
    %v107 = vld [vmem:[#allocation6 + $0x20] sm:$0xf]
    %v108 = vld [vmem:[#allocation6 + $0x24] sm:$0xf]
    %v109 = vld [vmem:[#allocation6 + $0x28] sm:$0xf]
    %v110 = vld [vmem:[#allocation6 + $0x2c] sm:$0xf]
    %v111 = vld [vmem:[#allocation6 + $0x30] sm:$0xf]
    %v112 = vld [vmem:[#allocation6 + $0x34] sm:$0xf]
    %v113 = vld [vmem:[#allocation6 + $0x38] sm:$0xf]
    %v114 = vld [vmem:[#allocation6 + $0x3c] sm:$0xf]
    %v115 = vld [vmem:[#allocation6 + $0x40] sm:$0xf]
    %v116 = vld [vmem:[#allocation6 + $0x44] sm:$0xf]
    %v117 = vld [vmem:[#allocation6 + $0x48] sm:$0xf]
    %v118 = vld [vmem:[#allocation6 + $0x4c] sm:$0xf]
    %v119 = vld [vmem:[#allocation6 + $0x50] sm:$0xf]
    %v120 = vld [vmem:[#allocation6 + $0x54] sm:$0xf]
    %v121 = vld [vmem:[#allocation6 + $0x58] sm:$0xf]
    %v122 = vld [vmem:[#allocation6 + $0x5c] sm:$0xf]
    %v123 = vld [vmem:[#allocation6 + $0x60] sm:$0xf]
    %v124 = vld [vmem:[#allocation6 + $0x64] sm:$0xf]
    %v125 = vld [vmem:[#allocation6 + $0x68] sm:$0xf]
    %v126 = vld [vmem:[#allocation6 + $0x6c] sm:$0xf]
    %v127 = vld [vmem:[#allocation6 + $0x70] sm:$0xf]
    %v128 = vld [vmem:[#allocation6 + $0x74] sm:$0xf]
    %v129 = vld [vmem:[#allocation6 + $0x78] sm:$0xf]
    %v130 = vld [vmem:[#allocation6 + $0x7c] sm:$0xf]
    %v147 = vunpack.c.l.b16 %v83
    %v148 = vunpack.c.h.b16 %v83
    %v149 = vunpack.c.l.b16 %v84
    %v150 = vunpack.c.h.b16 %v84
    %v151 = vunpack.c.l.b16 %v85
    %v152 = vunpack.c.h.b16 %v85
    %v153 = vunpack.c.l.b16 %v86
    %v154 = vunpack.c.h.b16 %v86
    %v155 = vunpack.c.l.b16 %v87
    %v156 = vunpack.c.h.b16 %v87
    %v157 = vunpack.c.l.b16 %v88
    %v158 = vunpack.c.h.b16 %v88
    %v159 = vunpack.c.l.b16 %v89
    %v160 = vunpack.c.h.b16 %v89
    %v161 = vunpack.c.l.b16 %v90
    %v162 = vunpack.c.h.b16 %v90
    %v163 = vunpack.c.l.b16 %v91
    %v164 = vunpack.c.h.b16 %v91
    %v165 = vunpack.c.l.b16 %v92
    %v166 = vunpack.c.h.b16 %v92
    %v167 = vunpack.c.l.b16 %v93
    %v168 = vunpack.c.h.b16 %v93
    %v169 = vunpack.c.l.b16 %v94
    %v170 = vunpack.c.h.b16 %v94
    %v171 = vunpack.c.l.b16 %v95
    %v172 = vunpack.c.h.b16 %v95
    %v173 = vunpack.c.l.b16 %v96
    %v174 = vunpack.c.h.b16 %v96
    %v175 = vunpack.c.l.b16 %v97
    %v176 = vunpack.c.h.b16 %v97
    %v177 = vunpack.c.l.b16 %v98
    %v178 = vunpack.c.h.b16 %v98
    %v179 = vpack.c.b16 %v149, %v147
    %v180 = vpack.c.b16 %v150, %v148
    %v181 = vpack.c.b16 %v153, %v151
    %v182 = vpack.c.b16 %v154, %v152
    %v183 = vpack.c.b16 %v157, %v155
    %v184 = vpack.c.b16 %v158, %v156
    %v185 = vpack.c.b16 %v161, %v159
    %v186 = vpack.c.b16 %v162, %v160
    %v187 = vpack.c.b16 %v165, %v163
    %v188 = vpack.c.b16 %v166, %v164
    %v189 = vpack.c.b16 %v169, %v167
    %v190 = vpack.c.b16 %v170, %v168
    %v191 = vpack.c.b16 %v173, %v171
    %v192 = vpack.c.b16 %v174, %v172
    %v193 = vpack.c.b16 %v177, %v175
    %v194 = vpack.c.b16 %v178, %v176
    %v243 = vunpack.c.l.b16 %v99
    %v244 = vunpack.c.l.b16 %v100
    %v245 = vunpack.c.l.b16 %v101
    %v246 = vunpack.c.l.b16 %v102
    %v247 = vunpack.c.l.b16 %v103
    %v248 = vunpack.c.l.b16 %v104
    %v249 = vunpack.c.l.b16 %v105
    %v250 = vunpack.c.l.b16 %v106
    %v251 = vunpack.c.l.b16 %v107
    %v252 = vunpack.c.l.b16 %v108
    %v253 = vunpack.c.l.b16 %v109
    %v254 = vunpack.c.l.b16 %v110
    %v255 = vunpack.c.l.b16 %v111
    %v256 = vunpack.c.l.b16 %v112
    %v257 = vunpack.c.l.b16 %v113
    %v258 = vunpack.c.l.b16 %v114
    %v259 = vunpack.c.l.b16 %v115
    %v260 = vunpack.c.l.b16 %v116
    %v261 = vunpack.c.l.b16 %v117
    %v262 = vunpack.c.l.b16 %v118
    %v263 = vunpack.c.l.b16 %v119
    %v264 = vunpack.c.l.b16 %v120
    %v265 = vunpack.c.l.b16 %v121
    %v266 = vunpack.c.l.b16 %v122
    %v267 = vunpack.c.l.b16 %v123
    %v268 = vunpack.c.l.b16 %v124
    %v269 = vunpack.c.l.b16 %v125
    %v270 = vunpack.c.l.b16 %v126
    %v271 = vunpack.c.l.b16 %v127
    %v272 = vunpack.c.l.b16 %v128
    %v273 = vunpack.c.l.b16 %v129
    %v274 = vunpack.c.l.b16 %v130
    %v275 = vpack.c.b16 %v244, %v243
    %v276 = vpack.c.b16 %v246, %v245
    %v277 = vpack.c.b16 %v248, %v247
    %v278 = vpack.c.b16 %v250, %v249
    %v279 = vpack.c.b16 %v252, %v251
    %v280 = vpack.c.b16 %v254, %v253
    %v281 = vpack.c.b16 %v256, %v255
    %v282 = vpack.c.b16 %v258, %v257
    %v283 = vpack.c.b16 %v260, %v259
    %v284 = vpack.c.b16 %v262, %v261
    %v285 = vpack.c.b16 %v264, %v263
    %v286 = vpack.c.b16 %v266, %v265
    %v287 = vpack.c.b16 %v268, %v267
    %v288 = vpack.c.b16 %v270, %v269
    %v289 = vpack.c.b16 %v272, %v271
    %v290 = vpack.c.b16 %v274, %v273
    %307 = vmatprep.subr.bf16.mxu0 0
    %308 = vmatpush1.bf16.msra.mxu0 %v275
    %309 = vmatprep.subr.bf16.mxu0 0
    %310 = vmatpush1.bf16.msra.mxu0 %v276
    %311 = vmatprep.subr.bf16.mxu0 0
    %312 = vmatpush1.bf16.msra.mxu0 %v277
    %313 = vmatprep.subr.bf16.mxu0 0
    %314 = vmatpush1.bf16.msra.mxu0 %v278
    %315 = vmatprep.subr.bf16.mxu0 0
    %316 = vmatpush1.bf16.msra.mxu0 %v279
    %317 = vmatprep.subr.bf16.mxu0 0
    %318 = vmatpush1.bf16.msra.mxu0 %v280
    %319 = vmatprep.subr.bf16.mxu0 0
    %320 = vmatpush1.bf16.msra.mxu0 %v281
    %321 = vmatprep.subr.bf16.mxu0 0
    %322 = vmatpush1.bf16.msra.mxu0 %v282
    %323 = vmatprep.subr.bf16.mxu0 0
    %324 = vmatpush1.bf16.msra.mxu0 %v283
    %325 = vmatprep.subr.bf16.mxu0 0
    %326 = vmatpush1.bf16.msra.mxu0 %v284
    %327 = vmatprep.subr.bf16.mxu0 0
    %328 = vmatpush1.bf16.msra.mxu0 %v285
    %329 = vmatprep.subr.bf16.mxu0 0
    %330 = vmatpush1.bf16.msra.mxu0 %v286
    %331 = vmatprep.subr.bf16.mxu0 0
    %332 = vmatpush1.bf16.msra.mxu0 %v287
    %333 = vmatprep.subr.bf16.mxu0 0
    %334 = vmatpush1.bf16.msra.mxu0 %v288
    %335 = vmatprep.subr.bf16.mxu0 0
    %336 = vmatpush1.bf16.msra.mxu0 %v289
    %337 = vmatprep.subr.bf16.mxu0 0
    %338 = vmatpush1.bf16.msra.mxu0 %v290
    %339 = vmatprep.mubr.bf16.mxu0 %v180
    %340 = vmatmul.mubr.bf16.gmra.mrb[0].mxu0 %v179
    %v341 = vpop.f32.mrb[0].mxu0
    %v342 = vadd.f32 0.0, %v341
    %v343 = vpop.f32.mrb[0].mxu0
    %v344 = vpop.f32.mrb[0].mxu0
    %v345 = vadd.f32 0.0, %v344
    %v346 = vpop.f32.mrb[0].mxu0
    %347 = vmatprep.mubr.bf16.mxu0 %v182
    %348 = vmatmul.mubr.bf16.gmra.mrb[0].mxu0 %v181
    %v349 = vpop.f32.mrb[0].mxu0
    %v350 = vadd.f32 0.0, %v349
    %v351 = vpop.f32.mrb[0].mxu0
    %v352 = vpop.f32.mrb[0].mxu0
    %v353 = vadd.f32 0.0, %v352
    %v354 = vpop.f32.mrb[0].mxu0
    %355 = vmatprep.mubr.bf16.mxu0 %v184
    %356 = vmatmul.mubr.bf16.gmra.mrb[0].mxu0 %v183
    %v357 = vpop.f32.mrb[0].mxu0
    %v358 = vadd.f32 0.0, %v357
    %v359 = vpop.f32.mrb[0].mxu0
    %v360 = vpop.f32.mrb[0].mxu0
    %v361 = vadd.f32 0.0, %v360
    %v362 = vpop.f32.mrb[0].mxu0
    %363 = vmatprep.mubr.bf16.mxu0 %v186
    %364 = vmatmul.mubr.bf16.gmra.mrb[0].mxu0 %v185
    %v365 = vpop.f32.mrb[0].mxu0
    %v366 = vadd.f32 0.0, %v365
    %v367 = vpop.f32.mrb[0].mxu0
    %v368 = vpop.f32.mrb[0].mxu0
    %v369 = vadd.f32 0.0, %v368
    %v370 = vpop.f32.mrb[0].mxu0
    %371 = vmatprep.mubr.bf16.mxu0 %v188
    %372 = vmatmul.mubr.bf16.gmra.mrb[0].mxu0 %v187
    %v373 = vpop.f32.mrb[0].mxu0
    %v374 = vadd.f32 0.0, %v373
    %v375 = vpop.f32.mrb[0].mxu0
    %v376 = vpop.f32.mrb[0].mxu0
    %v377 = vadd.f32 0.0, %v376
    %v378 = vpop.f32.mrb[0].mxu0
    %379 = vmatprep.mubr.bf16.mxu0 %v190
    %380 = vmatmul.mubr.bf16.gmra.mrb[0].mxu0 %v189
    %v381 = vpop.f32.mrb[0].mxu0
    %v382 = vadd.f32 0.0, %v381
    %v383 = vpop.f32.mrb[0].mxu0
    %v384 = vpop.f32.mrb[0].mxu0
    %v385 = vadd.f32 0.0, %v384
    %v386 = vpop.f32.mrb[0].mxu0
    %387 = vmatprep.mubr.bf16.mxu0 %v192
    %388 = vmatmul.mubr.bf16.gmra.mrb[0].mxu0 %v191
    %v389 = vpop.f32.mrb[0].mxu0
    %v390 = vadd.f32 0.0, %v389
    %v391 = vpop.f32.mrb[0].mxu0
    %v392 = vpop.f32.mrb[0].mxu0
    %v393 = vadd.f32 0.0, %v392
    %v394 = vpop.f32.mrb[0].mxu0
    %395 = vmatprep.mubr.bf16.mxu0 %v194
    %396 = vmatmul.mubr.bf16.gmra.mrb[0].mxu0 %v193
    %v397 = vpop.f32.mrb[0].mxu0
    %v398 = vadd.f32 0.0, %v397
    %v399 = vpop.f32.mrb[0].mxu0
    %v400 = vpop.f32.mrb[0].mxu0
    %v401 = vadd.f32 0.0, %v400
    %v402 = vpop.f32.mrb[0].mxu0
    %403 = vdwg.mxu0
    %v404 = vadd.f32 %v67, %v342
    %v405 = vadd.f32 %v68, %v345
    %v406 = vadd.f32 %v69, %v350
    %v407 = vadd.f32 %v70, %v353
    %v408 = vadd.f32 %v71, %v358
    %v409 = vadd.f32 %v72, %v361
    %v410 = vadd.f32 %v73, %v366
    %v411 = vadd.f32 %v74, %v369
    %v412 = vadd.f32 %v75, %v374
    %v413 = vadd.f32 %v76, %v377
    %v414 = vadd.f32 %v77, %v382
    %v415 = vadd.f32 %v78, %v385
    %v416 = vadd.f32 %v79, %v390
    %v417 = vadd.f32 %v80, %v393
    %v418 = vadd.f32 %v81, %v398
    %v419 = vadd.f32 %v82, %v401
    %420 = vst [vmem:[#allocation2] sm:$0xff] %v404
    %421 = vst [vmem:[#allocation2 + $0x8] sm:$0xff] %v405
    %422 = vst [vmem:[#allocation2 + $0x10] sm:$0xff] %v406
    %423 = vst [vmem:[#allocation2 + $0x18] sm:$0xff] %v407
    %424 = vst [vmem:[#allocation2 + $0x20] sm:$0xff] %v408
    %425 = vst [vmem:[#allocation2 + $0x28] sm:$0xff] %v409
    %426 = vst [vmem:[#allocation2 + $0x30] sm:$0xff] %v410
    %427 = vst [vmem:[#allocation2 + $0x38] sm:$0xff] %v411
    %428 = vst [vmem:[#allocation2 + $0x40] sm:$0xff] %v412
    %429 = vst [vmem:[#allocation2 + $0x48] sm:$0xff] %v413
    %430 = vst [vmem:[#allocation2 + $0x50] sm:$0xff] %v414
    %431 = vst [vmem:[#allocation2 + $0x58] sm:$0xff] %v415
    %432 = vst [vmem:[#allocation2 + $0x60] sm:$0xff] %v416
    %433 = vst [vmem:[#allocation2 + $0x68] sm:$0xff] %v417
    %434 = vst [vmem:[#allocation2 + $0x70] sm:$0xff] %v418
    %435 = vst [vmem:[#allocation2 + $0x78] sm:$0xff] %v419
    // Predicated region
    $region30: #{tpu_custom_call.1} parent=1 // pred_check
      %p436 = pneg %p47
    $region31: #{tpu_custom_call.1} parent=1 // pred_check_branch
      %438 = sbr.rel (%p436) target = $region33
    $region32: #{tpu_custom_call.1} parent=1 // pred_region
      %v439 = vld [vmem:[#allocation2] sm:$0xff]
      %v440 = vld [vmem:[#allocation2 + $0x8] sm:$0xff]
      %v441 = vld [vmem:[#allocation2 + $0x10] sm:$0xff]
      %v442 = vld [vmem:[#allocation2 + $0x18] sm:$0xff]
      %v443 = vld [vmem:[#allocation2 + $0x20] sm:$0xff]
      %v444 = vld [vmem:[#allocation2 + $0x28] sm:$0xff]
      %v445 = vld [vmem:[#allocation2 + $0x30] sm:$0xff]
      %v446 = vld [vmem:[#allocation2 + $0x38] sm:$0xff]
      %v447 = vld [vmem:[#allocation2 + $0x40] sm:$0xff]
      %v448 = vld [vmem:[#allocation2 + $0x48] sm:$0xff]
      %v449 = vld [vmem:[#allocation2 + $0x50] sm:$0xff]
      %v450 = vld [vmem:[#allocation2 + $0x58] sm:$0xff]
      %v451 = vld [vmem:[#allocation2 + $0x60] sm:$0xff]
      %v452 = vld [vmem:[#allocation2 + $0x68] sm:$0xff]
      %v453 = vld [vmem:[#allocation2 + $0x70] sm:$0xff]
      %v454 = vld [vmem:[#allocation2 + $0x78] sm:$0xff]
      %v455 = vld [vmem:[%s2] sm:$0x1]
      %v457 = vlaneseq
      %v458 = vshrl.u32 %v457, 7
      %v459 = vsub.s32 0, %v458
      %v460 = vrot.slane %v455, %v459
      %v462 = vmul.f32 %v439, %v460
      %v463 = vmul.f32 %v440, %v460
      %v464 = vmul.f32 %v441, %v460
      %v465 = vmul.f32 %v442, %v460
      %v466 = vmul.f32 %v443, %v460
      %v467 = vmul.f32 %v444, %v460
      %v468 = vmul.f32 %v445, %v460
      %v469 = vmul.f32 %v446, %v460
      %v470 = vmul.f32 %v447, %v460
      %v471 = vmul.f32 %v448, %v460
      %v472 = vmul.f32 %v449, %v460
      %v473 = vmul.f32 %v450, %v460
      %v474 = vmul.f32 %v451, %v460
      %v475 = vmul.f32 %v452, %v460
      %v476 = vmul.f32 %v453, %v460
      %v477 = vmul.f32 %v454, %v460
      %v478 = vld [vmem:[%s3] sm:$0x1]
      %v480 = vlaneseq
      %v481 = vshrl.u32 %v480, 7
      %v482 = vsub.s32 0, %v481
      %v483 = vrot.slane %v478, %v482
      %v485 = vadd.f32 %v462, %v483
      %v486 = vadd.f32 %v463, %v483
      %v487 = vadd.f32 %v464, %v483
      %v488 = vadd.f32 %v465, %v483
      %v489 = vadd.f32 %v466, %v483
      %v490 = vadd.f32 %v467, %v483
      %v491 = vadd.f32 %v468, %v483
      %v492 = vadd.f32 %v469, %v483
      %v493 = vadd.f32 %v470, %v483
      %v494 = vadd.f32 %v471, %v483
      %v495 = vadd.f32 %v472, %v483
      %v496 = vadd.f32 %v473, %v483
      %v497 = vadd.f32 %v474, %v483
      %v498 = vadd.f32 %v475, %v483
      %v499 = vadd.f32 %v476, %v483
      %v500 = vadd.f32 %v477, %v483
      %v501 = vmax.f32 %v485, 0.0
      %v502 = vmax.f32 %v486, 0.0
      %v503 = vmax.f32 %v487, 0.0
      %v504 = vmax.f32 %v488, 0.0
      %v505 = vmax.f32 %v489, 0.0
      %v506 = vmax.f32 %v490, 0.0
      %v507 = vmax.f32 %v491, 0.0
      %v508 = vmax.f32 %v492, 0.0
      %v509 = vmax.f32 %v493, 0.0
      %v510 = vmax.f32 %v494, 0.0
      %v511 = vmax.f32 %v495, 0.0
      %v512 = vmax.f32 %v496, 0.0
      %v513 = vmax.f32 %v497, 0.0
      %v514 = vmax.f32 %v498, 0.0
      %v515 = vmax.f32 %v499, 0.0
      %v516 = vmax.f32 %v500, 0.0
      %v517 = vpack.c.bf16 %v502, %v501
      %v518 = vpack.c.bf16 %v504, %v503
      %v519 = vpack.c.bf16 %v506, %v505
      %v520 = vpack.c.bf16 %v508, %v507
      %v521 = vpack.c.bf16 %v510, %v509
      %v522 = vpack.c.bf16 %v512, %v511
      %v523 = vpack.c.bf16 %v514, %v513
      %v524 = vpack.c.bf16 %v516, %v515
      %v533 = vunpack.c.l.b16 %v517
      %v534 = vunpack.c.h.b16 %v517
      %v535 = vunpack.c.l.b16 %v518
      %v536 = vunpack.c.h.b16 %v518
      %v537 = vunpack.c.l.b16 %v519
      %v538 = vunpack.c.h.b16 %v519
      %v539 = vunpack.c.l.b16 %v520
      %v540 = vunpack.c.h.b16 %v520
      %v541 = vunpack.c.l.b16 %v521
      %v542 = vunpack.c.h.b16 %v521
      %v543 = vunpack.c.l.b16 %v522
      %v544 = vunpack.c.h.b16 %v522
      %v545 = vunpack.c.l.b16 %v523
      %v546 = vunpack.c.h.b16 %v523
      %v547 = vunpack.c.l.b16 %v524
      %v548 = vunpack.c.h.b16 %v524
      %v549 = vpack.c.b16 %v533, %v533
      %v550 = vpack.c.b16 %v534, %v534
      %v551 = vpack.c.b16 %v535, %v535
      %v552 = vpack.c.b16 %v536, %v536
      %v553 = vpack.c.b16 %v537, %v537
      %v554 = vpack.c.b16 %v538, %v538
      %v555 = vpack.c.b16 %v539, %v539
      %v556 = vpack.c.b16 %v540, %v540
      %v557 = vpack.c.b16 %v541, %v541
      %v558 = vpack.c.b16 %v542, %v542
      %v559 = vpack.c.b16 %v543, %v543
      %v560 = vpack.c.b16 %v544, %v544
      %v561 = vpack.c.b16 %v545, %v545
      %v562 = vpack.c.b16 %v546, %v546
      %v563 = vpack.c.b16 %v547, %v547
      %v564 = vpack.c.b16 %v548, %v548
      %581 = vst [vmem:[#allocation8] sm:$0xf] %v549
      %582 = vst [vmem:[#allocation8 + $0x4] sm:$0xf] %v550
      %583 = vst [vmem:[#allocation8 + $0x8] sm:$0xf] %v551
      %584 = vst [vmem:[#allocation8 + $0xc] sm:$0xf] %v552
      %585 = vst [vmem:[#allocation8 + $0x10] sm:$0xf] %v553
      %586 = vst [vmem:[#allocation8 + $0x14] sm:$0xf] %v554
      %587 = vst [vmem:[#allocation8 + $0x18] sm:$0xf] %v555
      %588 = vst [vmem:[#allocation8 + $0x1c] sm:$0xf] %v556
      %589 = vst [vmem:[#allocation8 + $0x20] sm:$0xf] %v557
      %590 = vst [vmem:[#allocation8 + $0x24] sm:$0xf] %v558
      %591 = vst [vmem:[#allocation8 + $0x28] sm:$0xf] %v559
      %592 = vst [vmem:[#allocation8 + $0x2c] sm:$0xf] %v560
      %593 = vst [vmem:[#allocation8 + $0x30] sm:$0xf] %v561
      %594 = vst [vmem:[#allocation8 + $0x34] sm:$0xf] %v562
      %595 = vst [vmem:[#allocation8 + $0x38] sm:$0xf] %v563
      %596 = vst [vmem:[#allocation8 + $0x3c] sm:$0xf] %v564
    $region33: #{tpu_custom_call.1} parent=1 // pred_fallthru
      _
    // Predicated region
    $region34: #{tpu_custom_call.1} parent=1 // pred_check
      _
    $region35: #{tpu_custom_call.1} parent=1 // pred_check_branch
      %598 = sbr.rel (0) target = $region37
    $region36: #{tpu_custom_call.1} parent=1 // pred_region
      %s600 = ssub.s32 1024, 1024
      %601 = vsyncadd [#allocation5], %s600
      %s602 = sshll.u32 [#allocation8], 4
      %s603 = int_to_ptr.vmem [resolvable:$true] %s602
      %608 = dma.vmem_to_hbm [thread:$0]  %s603, 1024, %s4, [#allocation5], 64, 64, 4
    $region37: #{tpu_custom_call.1} parent=1 // pred_fallthru
      _
    // Predicated region
    $region38: #{tpu_custom_call.1} parent=1 // pred_check
      _
    $region39: #{tpu_custom_call.1} parent=1 // pred_check_branch
      %610 = sbr.rel (0) target = $region41
    $region40: #{tpu_custom_call.1} parent=1 // pred_region
      %611 = dma.done [#allocation5], 1024
    $region41: #{tpu_custom_call.1} parent=1 // pred_fallthru
      _
    %612 = vsyncpa [#allocation4], 1
    %613 = vsyncpa [#allocation7], 1
    %614 = vsyncpa [#allocation5], 1

</llo_original>
